<compile_context>
chip_gen: v7x
topology: tpu7x:2x2x1
jax: 0.10.0
libtpu: 0.0.40
codegen_flags: <defaults>
</compile_context>

<pallas_src>
import functools

import jax
import jax.numpy as jnp
from jax.experimental import pallas as pl
from jax.experimental.pallas import tpu as pltpu

VS_NON_EXIST = 0
VS_EXIST_STOP = 1
VS_EXIST_CONTINUE = 2


# ---------------------------------------------------------------------------
# Tiling helpers
# ---------------------------------------------------------------------------
def _m_tiling(m, cap=256):
    """Row tile size; avoids any HBM padding when m already divides a tile."""
    tm = cap
    while tm > 8 and m % tm:
        tm //= 2
    if m % tm == 0:
        return m, tm
    if m <= 1024:                      # small ragged M: one full block
        return m, m
    mp = ((m + cap - 1) // cap) * cap  # rare fallback: pad M
    return mp, cap


def _k_tiling(k):
    """Single K block when small, else 512-wide K tiles with an accumulator."""
    if k <= 2048:
        return k, k
    tk = 512
    return ((k + tk - 1) // tk) * tk, tk


# ---------------------------------------------------------------------------
# Pallas GEMM: y = act(x @ w + b), optional fused GroupNorm prologue on x.
#   - bf16 operands on the MXU, f32 VMEM accumulator
#   - grid (M-tiles, N-tiles, K-tiles); K is the reduction ("arbitrary") axis
#   - N padded to a multiple of 128 -> lane-dense output stores
# ---------------------------------------------------------------------------
def _mm_kernel(*refs, apply_relu, nsteps_k, fuse_norm):
    if fuse_norm:
        x_ref, w_ref, b_ref, s_ref, t_ref, o_ref, acc_ref = refs
    else:
        x_ref, w_ref, b_ref, o_ref, acc_ref = refs

    @pl.when(pl.program_id(2) == 0)
    def _():
        acc_ref[...] = jnp.zeros_like(acc_ref)

    if fuse_norm:
        # GroupNorm normalize+affine fused as a GEMM prologue (per-K-column).
        xb = (x_ref[...].astype(jnp.float32) * s_ref[...] + t_ref[...]
              ).astype(jnp.bfloat16)
    else:
        xb = x_ref[...]
        if xb.dtype != jnp.bfloat16:
            xb = xb.astype(jnp.bfloat16)

    acc_ref[...] += jnp.dot(xb, w_ref[...], preferred_element_type=jnp.float32)

    @pl.when(pl.program_id(2) == nsteps_k - 1)
    def _():
        y = acc_ref[...] + b_ref[...]
        if apply_relu:
            y = jnp.maximum(y, 0.0)
        o_ref[...] = y.astype(o_ref.dtype)


@functools.partial(jax.jit, static_argnames=("relu",))
def matmul_bias_act(x, w, b=None, scale=None, shift=None, relu=False):
    """y = act((x*scale+shift) @ w + b); x:(M,K[p]), w:(K,N) -> (M,N) f32."""
    M, Kx = x.shape
    K, N = w.shape
    Kp, tk = _k_tiling(K)
    assert Kx in (K, Kp)
    Mp, tm = _m_tiling(M, cap=256)
    Np = ((N + 127) // 128) * 128
    tn = 256 if Np % 256 == 0 else 128
    fuse_norm = scale is not None

    xb = x
    if Kx < Kp or Mp > M:
        xb = jnp.pad(x, ((0, Mp - M), (0, Kp - Kx)))
    wb = jnp.asarray(w, jnp.bfloat16)
    if Kp > K or Np > N:
        wb = jnp.pad(wb, ((0, Kp - K), (0, Np - N)))
    if b is None:
        b2 = jnp.zeros((1, Np), jnp.float32)
    else:
        b2 = jnp.pad(jnp.asarray(b, jnp.float32).reshape(1, N),
                     ((0, 0), (0, Np - N)))

    in_specs = [
        pl.BlockSpec((tm, tk), lambda i, j, k: (i, k)),
        pl.BlockSpec((tk, tn), lambda i, j, k: (k, j)),
        pl.BlockSpec((1, tn), lambda i, j, k: (0, j)),
    ]
    args = [xb, wb, b2]
    if fuse_norm:
        s2 = jnp.asarray(scale, jnp.float32).reshape(1, -1)
        t2 = jnp.asarray(shift, jnp.float32).reshape(1, -1)
        if s2.shape[1] < Kp:
            s2 = jnp.pad(s2, ((0, 0), (0, Kp - s2.shape[1])),
                         constant_values=1.0)
            t2 = jnp.pad(t2, ((0, 0), (0, Kp - t2.shape[1])))
        in_specs += [pl.BlockSpec((1, tk), lambda i, j, k: (0, k)),
                     pl.BlockSpec((1, tk), lambda i, j, k: (0, k))]
        args += [s2, t2]

    nsteps_k = Kp // tk
    out = pl.pallas_call(
        functools.partial(_mm_kernel, apply_relu=relu, nsteps_k=nsteps_k,
                          fuse_norm=fuse_norm),
        out_shape=jax.ShapeDtypeStruct((Mp, Np), jnp.float32),
        grid_spec=pltpu.PrefetchScalarGridSpec(
            num_scalar_prefetch=0,
            grid=(Mp // tm, Np // tn, nsteps_k),
            in_specs=in_specs,
            out_specs=pl.BlockSpec((tm, tn), lambda i, j, k: (i, j)),
            scratch_shapes=[pltpu.VMEM((tm, tn), jnp.float32)]),
        compiler_params=pltpu.CompilerParams(
            dimension_semantics=("parallel", "parallel", "arbitrary"),
            vmem_limit_bytes=48 * 1024 * 1024),
    )(*args)
    if Mp > M or Np > N:
        out = out[:M, :N]
    return out


# ---------------------------------------------------------------------------
# GroupNorm: one-pass gridded sum / sum-of-squares reduction, then either a
# gridded normalize kernel (-> bf16) or fusion into the GEMM prologue.
# ---------------------------------------------------------------------------
def _gn_stats_kernel(x_ref, sum_ref, sq_ref):
    @pl.when(pl.program_id(0) == 0)
    def _():
        sum_ref[...] = jnp.zeros_like(sum_ref)
        sq_ref[...] = jnp.zeros_like(sq_ref)
    x = x_ref[...].astype(jnp.float32)
    sum_ref[...] += jnp.sum(x, axis=0, keepdims=True)
    sq_ref[...] += jnp.sum(x * x, axis=0, keepdims=True)


@functools.partial(jax.jit, static_argnames=("num_groups",))
def group_norm_scale_shift(x, gamma, beta, num_groups, eps=1e-5):
    """Per-channel scale/shift so that y = x*scale + shift == GroupNorm(x)."""
    n, c = x.shape
    np_, tm = _m_tiling(n, cap=512)
    xs = x if np_ == n else jnp.pad(x, ((0, np_ - n), (0, 0)))
    s, ss = pl.pallas_call(
        _gn_stats_kernel,
        out_shape=(jax.ShapeDtypeStruct((1, c), jnp.float32),
                   jax.ShapeDtypeStruct((1, c), jnp.float32)),
        grid_spec=pltpu.PrefetchScalarGridSpec(
            num_scalar_prefetch=0,
            grid=(np_ // tm,),
            in_specs=[pl.BlockSpec((tm, c), lambda i: (i, 0))],
            out_specs=[pl.BlockSpec((1, c), lambda i: (0, 0)),
                       pl.BlockSpec((1, c), lambda i: (0, 0))]),
        compiler_params=pltpu.CompilerParams(
            dimension_semantics=("arbitrary",)),
    )(xs)
    cg = c // num_groups
    cnt = float(n * cg)                       # true voxel count (pad rows are 0)
    g_sum = s.reshape(num_groups, cg).sum(axis=1)
    g_sq = ss.reshape(num_groups, cg).sum(axis=1)
    mu = g_sum / cnt
    var = jnp.maximum(g_sq / cnt - mu * mu, 0.0)
    inv = jax.lax.rsqrt(var + eps)
    scale = jnp.asarray(gamma, jnp.float32) * jnp.repeat(inv, cg)
    shift = jnp.asarray(beta, jnp.float32) - jnp.repeat(mu, cg) * scale
    return scale.reshape(1, c), shift.reshape(1, c)


def _gn_apply_kernel(x_ref, s_ref, t_ref, o_ref):
    o_ref[...] = (x_ref[...].astype(jnp.float32) * s_ref[...] + t_ref[...]
                  ).astype(o_ref.dtype)


@jax.jit
def group_norm_apply(x, scale, shift):
    """y = x*scale + shift, emitted in bf16 (feeds the conv GEMM)."""
    n, c = x.shape
    np_, tm = _m_tiling(n, cap=512)
    xs = x if np_ == n else jnp.pad(x, ((0, np_ - n), (0, 0)))
    out = pl.pallas_call(
        _gn_apply_kernel,
        out_shape=jax.ShapeDtypeStruct((np_, c), jnp.bfloat16),
        grid_spec=pltpu.PrefetchScalarGridSpec(
            num_scalar_prefetch=0,
            grid=(np_ // tm,),
            in_specs=[pl.BlockSpec((tm, c), lambda i: (i, 0)),
                      pl.BlockSpec((1, c), lambda i: (0, 0)),
                      pl.BlockSpec((1, c), lambda i: (0, 0))],
            out_specs=pl.BlockSpec((tm, c), lambda i: (i, 0))),
        compiler_params=pltpu.CompilerParams(
            dimension_semantics=("parallel",)),
    )(xs, scale, shift)
    return out if np_ == n else out[:n]


# ---------------------------------------------------------------------------
# Dense-grid glue (neighborhood gather, pooling, upsampling)
# ---------------------------------------------------------------------------
def im2col3(x_grid, k_pad=0):
    """(D,H,W,C) -> (D*H*W, 27*C[+k_pad]); zero-padded 3x3x3 neighborhoods.

    Column order is (kd, kh, kw, Cin): weight row (kd*9+kh*3+kw)*Cin + ci
    corresponds to torch Conv3d weight[co, ci, kd, kh, kw].  Built directly in
    bf16; K padding columns are appended here so no extra HBM copy is needed.
    """
    # TODO(synk): replace im2col materialization with a 27-tap accumulation
    # grid inside the GEMM kernel to remove the ~27x inflated HBM traffic.
    d, h, w, c = x_grid.shape
    xp = jnp.pad(x_grid, ((1, 1), (1, 1), (1, 1), (0, 0)))
    cols = []
    for kd in range(3):
        for kh in range(3):
            for kw in range(3):
                cols.append(xp[kd:kd + d, kh:kh + h, kw:kw + w, :])
    if k_pad:
        cols.append(jnp.zeros((d, h, w, k_pad), x_grid.dtype))
    return jnp.concatenate(cols, axis=-1).reshape(d * h * w, 27 * c + k_pad)


def maxpool2(x_grid):
    d, h, w, c = x_grid.shape
    return x_grid.reshape(d // 2, 2, h // 2, 2, w // 2, 2, c).max(axis=(1, 3, 5))


def upsample_nearest2(x_grid):
    x = jnp.repeat(x_grid, 2, axis=0)
    x = jnp.repeat(x, 2, axis=1)
    x = jnp.repeat(x, 2, axis=2)
    return x


# ---------------------------------------------------------------------------
# Deterministic parameter construction (mirrors the module's __init__ shapes)
# ---------------------------------------------------------------------------
class ParamGen:
    def __init__(self, seed=0):
        self._key = jax.random.PRNGKey(seed)

    def normal(self, shape, scale=0.05):
        self._key, sub = jax.random.split(self._key)
        return scale * jax.random.normal(sub, shape, jnp.float32)


def _conv_block_params(pg, cin, cout, num_groups, ksize=3):
    """order='gcr' SparseConvBlock: GroupNorm(cin) -> Conv(k, bias=False) -> ReLU."""
    g = num_groups if cin >= num_groups else 1
    assert cin % g == 0
    return {
        "gn_gamma": jnp.ones((cin,), jnp.float32),
        "gn_beta": jnp.zeros((cin,), jnp.float32),
        "gn_groups": g,
        "ksize": ksize,
        # weights stored once in bf16 (MXU-native operand dtype)
        "w": pg.normal((ksize ** 3 * cin, cout)).astype(jnp.bfloat16),
    }


def _double_conv_params(pg, cin, cout, num_groups, encoder):
    if encoder:
        c1o = cout // 2
        if c1o < cin:
            c1o = cin
        return {"conv1": _conv_block_params(pg, cin, c1o, num_groups),
                "conv2": _conv_block_params(pg, c1o, cout, num_groups)}
    return {"conv1": _conv_block_params(pg, cin, cout, num_groups),
            "conv2": _conv_block_params(pg, cout, cout, num_groups)}


def _head_params(pg, cin, cout, num_groups, enhanced=False):
    p = {"sc1": _conv_block_params(pg, cin, cin, num_groups),
         "enhanced": enhanced}
    if enhanced:
        mid = min(64, cin)
        p["sc2"] = _conv_block_params(pg, cin, mid, num_groups)
        p["one"] = _conv_block_params(pg, mid, mid, num_groups, ksize=1)
        p["out_w"] = pg.normal((mid, cout)).astype(jnp.bfloat16)
    else:
        p["out_w"] = pg.normal((cin, cout)).astype(jnp.bfloat16)
    p["out_b"] = pg.normal((cout,))
    return p


# ---------------------------------------------------------------------------
# Functional blocks (GroupNorm -> Conv -> ReLU, double conv, heads)
# ---------------------------------------------------------------------------
def apply_conv_block(x_grid, p):
    d, h, w, c = x_grid.shape
    flat = x_grid.reshape(-1, c)
    scale, shift = group_norm_scale_shift(
        flat, p["gn_gamma"], p["gn_beta"], num_groups=p["gn_groups"])
    if p["ksize"] == 3:
        # normalize (bf16) -> im2col (bf16, K pre-padded) -> tiled GEMM+ReLU
        xn = group_norm_apply(flat, scale, shift)
        kp, _ = _k_tiling(27 * c)
        cols = im2col3(xn.reshape(d, h, w, c), k_pad=kp - 27 * c)
        y = matmul_bias_act(cols, p["w"], relu=True)
    else:
        # 1x1x1 conv: GroupNorm fused into the GEMM prologue (no extra pass)
        y = matmul_bias_act(flat, p["w"], scale=scale, shift=shift, relu=True)
    return y.reshape(d, h, w, -1)


def apply_double_conv(x_grid, p):
    return apply_conv_block(apply_conv_block(x_grid, p["conv1"]), p["conv2"])


def apply_head(x_grid, p):
    h = apply_conv_block(x_grid, p["sc1"])
    if p["enhanced"]:
        h = apply_conv_block(h, p["sc2"])
        h = apply_conv_block(h, p["one"])
    c = h.shape[-1]
    # OutConv: 1x1x1 conv with bias, no activation -> (num_voxels, cout)
    return matmul_bias_act(h.reshape(-1, c), p["out_w"], p["out_b"], relu=False)


# ---------------------------------------------------------------------------
# SparseStructureNet (dense emulation)
# ---------------------------------------------------------------------------
class SparseStructureNetPallas:
    def __init__(self, in_channels, num_blocks, basis_channels,
                 normal_channels=3, f_maps=64, num_groups=8,
                 udf_branch_dim=16, seed=0):
        self.num_blocks = num_blocks
        self.basis_channels = basis_channels
        self.normal_channels = normal_channels
        self.udf_branch_dim = udf_branch_dim
        n_features = [in_channels] + [f_maps * 2 ** k for k in range(num_blocks)]
        pg = ParamGen(seed)

        self.encoders = [
            _double_conv_params(pg, n_features[l], n_features[l + 1],
                                num_groups, encoder=True)
            for l in range(num_blocks)
        ]
        self.struct_heads, self.udf_heads = [], []
        self.normal_heads, self.basis_heads = [], []
        self.decoders = []
        for layer_idx in range(-1, -num_blocks - 1, -1):
            nf = n_features[layer_idx]
            self.struct_heads.append(_head_params(pg, nf, 3, num_groups))
            self.udf_heads.append(
                _head_params(pg, nf, udf_branch_dim, num_groups)
                if udf_branch_dim > 0 else None)
            self.normal_heads.append(
                _head_params(pg, nf, normal_channels, num_groups)
                if normal_channels > 0 else None)
            self.basis_heads.append(
                _head_params(pg, nf, basis_channels, num_groups, enhanced=True))
            if layer_idx < -1:
                self.decoders.append(
                    _double_conv_params(pg, n_features[layer_idx + 1] + nf, nf,
                                        num_groups, encoder=False))

    def forward(self, feat_grid, adaptive_depth):
        res = {"structure": {}, "normal": {}, "basis": {}, "udf": {}}
        enc_feats = {}
        depth = 0
        x = feat_grid
        # ----- encoder path -----
        for l in range(self.num_blocks):
            if l > 0:
                x = maxpool2(x)       # pooling='max' for layer_idx > 0
                depth += 1
            x = apply_double_conv(x, self.encoders[l])
            enc_feats[depth] = x
        x = enc_feats[depth]
        # TODO(synk): build_neck_grid + SparseZeroPadding onto the dense neck
        # grid is an identity in this all-voxels-active dense emulation.
        upsample_mask = None
        # ----- decoder path with structure-driven pruning -----
        for i in range(self.num_blocks):
            if i > 0:
                if upsample_mask is not None:
                    x = x * upsample_mask[..., None]     # masked upsampling
                x = upsample_nearest2(x)                 # Upsampling(2,'nearest')
                depth -= 1
                skip = enc_feats[depth]                  # padding -> identity here
                # TODO(synk): feed skip/x as two K-segments of the conv GEMM
                # instead of materializing the concatenation in HBM.
                x = jnp.concatenate([skip, x], axis=-1)
                x = apply_double_conv(x, self.decoders[i - 1])
            d, h, w, _ = x.shape
            struct = apply_head(x, self.struct_heads[i])
            res["structure"][depth] = struct
            if self.udf_heads[i] is not None:
                res["udf"][depth] = apply_head(x, self.udf_heads[i])
            decision = jnp.argmax(struct, axis=1).astype(jnp.uint8)
            exist = decision != VS_NON_EXIST
            cont = decision == VS_EXIST_CONTINUE
            flags = jnp.stack([jnp.any(exist), jnp.any(cont)])
            # TODO(synk): decoder_svh.build_from_grid_coords prunes voxel sets;
            # the dense emulation zero-masks pruned voxels instead.
            x_masked = x * exist.reshape(d, h, w, 1).astype(x.dtype)
            upsample_mask_next = cont.reshape(d, h, w).astype(x.dtype)
            # Speculatively dispatch the remaining per-level heads so that the
            # single host sync below overlaps with their execution.
            normal_out = None
            if depth < adaptive_depth and self.normal_heads[i] is not None:
                normal_out = apply_head(x_masked, self.normal_heads[i])
            basis_out = apply_head(x_masked, self.basis_heads[i])
            any_exist, any_cont = (bool(v) for v in jax.device_get(flags))
            if not any_exist:
                break                                   # discard speculative work
            x = x_masked
            upsample_mask = upsample_mask_next
            if normal_out is not None:
                res["normal"][depth] = normal_out
            res["basis"][depth] = basis_out
            if not any_cont:
                break
        # FeaturesSet.populate_empty
        for d_ in range(self.num_blocks):
            for key, dim in (("structure", 3),
                             ("normal", self.normal_channels),
                             ("basis", self.basis_channels),
                             ("udf", self.udf_branch_dim)):
                if dim > 0 and d_ not in res[key]:
                    res[key][d_] = jnp.zeros((0, dim), jnp.float32)
        return res


if __name__ == "__main__":
    key = jax.random.PRNGKey(0)
    D = H = W = 8
    in_channels = 4
    feat_grid = jax.random.normal(key, (D, H, W, in_channels), jnp.float32)

    net = SparseStructureNetPallas(
        in_channels=in_channels, num_blocks=2, basis_channels=4,
        normal_channels=3, f_maps=8, num_groups=4, udf_branch_dim=4, seed=0)

    res = net.forward(feat_grid, adaptive_depth=2)
    jax.block_until_ready(res)
    print("KERNEL_OK")
</pallas_src>

<mosaic_0001>
module attributes {stable_mosaic.version = 11 : i64} {
  func.func @_gn_stats_kernel(%arg0: i32, %arg1: memref<512x4xf32, #tpu.memory_space<vmem>>, %arg2: memref<1x4xf32, #tpu.memory_space<vmem>>, %arg3: memref<1x4xf32, #tpu.memory_space<vmem>>) attributes {dimension_semantics = [#tpu.dimension_semantics<arbitrary>], iteration_bounds = array<i64: 1>, scalar_prefetch = 0 : i64, scratch_operands = 0 : i64, tpu.core_type = #tpu.core_type<tc>, window_params = [{transform_indices = @transform_0, window_bounds = array<i64: 512, 4>}, {pipeline_mode = #tpu.pipeline_mode<synchronous>, transform_indices = @transform_1, window_bounds = array<i64: 1, 4>}, {pipeline_mode = #tpu.pipeline_mode<synchronous>, transform_indices = @transform_2, window_bounds = array<i64: 1, 4>}]} {
    %c0_i32 = arith.constant 0 : i32
    %0 = arith.cmpi eq, %arg0, %c0_i32 : i32
    %1 = arith.extui %0 : i1 to i32
    %c0_i32_0 = arith.constant 0 : i32
    %2 = arith.cmpi ne, %1, %c0_i32_0 : i32
    scf.if %2 {
      %cst_11 = arith.constant 0.000000e+00 : f32
      %15 = vector.broadcast %cst_11 : f32 to vector<1x4xf32>
      %c0_12 = arith.constant 0 : index
      %c0_13 = arith.constant 0 : index
      %16 = vector.load %arg2[%c0_12, %c0_13] : memref<1x4xf32, #tpu.memory_space<vmem>>, vector<1x4xf32>
      tpu.vector_store %arg2[%c0_12, %c0_13], %15 {strides = array<i32>} : memref<1x4xf32, #tpu.memory_space<vmem>>, vector<1x4xf32>,
      %cst_14 = arith.constant 0.000000e+00 : f32
      %17 = vector.broadcast %cst_14 : f32 to vector<1x4xf32>
      %c0_15 = arith.constant 0 : index
      %c0_16 = arith.constant 0 : index
      %18 = vector.load %arg3[%c0_15, %c0_16] : memref<1x4xf32, #tpu.memory_space<vmem>>, vector<1x4xf32>
      tpu.vector_store %arg3[%c0_15, %c0_16], %17 {strides = array<i32>} : memref<1x4xf32, #tpu.memory_space<vmem>>, vector<1x4xf32>,
    } else {
    }
    %c0 = arith.constant 0 : index
    %c0_1 = arith.constant 0 : index
    %3 = vector.load %arg1[%c0, %c0_1] : memref<512x4xf32, #tpu.memory_space<vmem>>, vector<512x4xf32>
    %c0_2 = arith.constant 0 : index
    %c0_3 = arith.constant 0 : index
    %4 = vector.load %arg2[%c0_2, %c0_3] : memref<1x4xf32, #tpu.memory_space<vmem>>, vector<1x4xf32>
    %cst = arith.constant dense<0.000000e+00> : vector<4xf32>
    %5 = vector.multi_reduction <add>, %3, %cst [0] : vector<512x4xf32> to vector<4xf32>
    %6 = vector.shape_cast %5 : vector<4xf32> to vector<1x4xf32>
    %7 = arith.addf %4, %6 : vector<1x4xf32>
    %c0_4 = arith.constant 0 : index
    %c0_5 = arith.constant 0 : index
    %8 = vector.load %arg2[%c0_4, %c0_5] : memref<1x4xf32, #tpu.memory_space<vmem>>, vector<1x4xf32>
    tpu.vector_store %arg2[%c0_4, %c0_5], %7 {strides = array<i32>} : memref<1x4xf32, #tpu.memory_space<vmem>>, vector<1x4xf32>,
    %c0_6 = arith.constant 0 : index
    %c0_7 = arith.constant 0 : index
    %9 = vector.load %arg3[%c0_6, %c0_7] : memref<1x4xf32, #tpu.memory_space<vmem>>, vector<1x4xf32>
    %10 = arith.mulf %3, %3 : vector<512x4xf32>
    %cst_8 = arith.constant dense<0.000000e+00> : vector<4xf32>
    %11 = vector.multi_reduction <add>, %10, %cst_8 [0] : vector<512x4xf32> to vector<4xf32>
    %12 = vector.shape_cast %11 : vector<4xf32> to vector<1x4xf32>
    %13 = arith.addf %9, %12 : vector<1x4xf32>
    %c0_9 = arith.constant 0 : index
    %c0_10 = arith.constant 0 : index
    %14 = vector.load %arg3[%c0_9, %c0_10] : memref<1x4xf32, #tpu.memory_space<vmem>>, vector<1x4xf32>
    tpu.vector_store %arg3[%c0_9, %c0_10], %13 {strides = array<i32>} : memref<1x4xf32, #tpu.memory_space<vmem>>, vector<1x4xf32>,
    return
  }
  func.func @transform_0(%arg0: i32) -> (i32, i32) {
    %c0_i32 = arith.constant 0 : i32
    %c0_i32_0 = arith.constant 0 : i32
    return %arg0, %c0_i32 : i32, i32
  }
  func.func @transform_1(%arg0: i32) -> (i32, i32) {
    %c0_i32 = arith.constant 0 : i32
    %c0_i32_0 = arith.constant 0 : i32
    %c0_i32_1 = arith.constant 0 : i32
    return %c0_i32, %c0_i32_0 : i32, i32
  }
  func.func @transform_2(%arg0: i32) -> (i32, i32) {
    %c0_i32 = arith.constant 0 : i32
    %c0_i32_0 = arith.constant 0 : i32
    %c0_i32_1 = arith.constant 0 : i32
    return %c0_i32, %c0_i32_0 : i32, i32
  }
}

</mosaic_0001>

<llo_original>
// kernel: group_norm_scale_shift.1
$region0: #{group_norm_scale_shift.1}
  #allocation0 [shape = 'u32[]', space=smem, size = 0x4, offset = 0x4, fixed_abs, tag = 'smem constant byte address 0x4 - core index']
  #allocation1 [shape = 'u32[144,128]{1,0:T(1,128)}', space=vmem, size = 0x12000, scoped, tag = 'internal scratch']
  %s0 = inlined_call_operand.vmem [shape: f32[512,4], index: 0, kind: input, shape index: {}]
  %s1 = inlined_call_operand.vmem [shape: f32[1,4], index: 1, kind: output, shape index: {0}]
  %s2 = inlined_call_operand.vmem [shape: f32[1,4], index: 2, kind: output, shape index: {1}]
  %3 = xla_tuple %s1, %s2
  %s4 = sld [smem:[#allocation0]]
  $region26: #{group_norm_scale_shift.1} parent=0
    _
  %s6 = ssub.s32 1, %s4
  %s7 = scalar_select 0, %s6, %s4
  // Predicated region
  $region2: #{group_norm_scale_shift.1} parent=0 // pred_check
    _
  $region3: #{group_norm_scale_shift.1} parent=0 // pred_check_branch
    %9 = sbr.rel (0) target = $region5
  $region4: #{group_norm_scale_shift.1} parent=0 // pred_region
    _
  $region5: #{group_norm_scale_shift.1} parent=0 // pred_fallthru
    _
  %p10 = scmp.eq.s32.totalorder 0, 0
  // Predicated region
  $region6: #{group_norm_scale_shift.1} parent=0 // pred_check
    %p11 = pneg %p10
  $region7: #{group_norm_scale_shift.1} parent=0 // pred_check_branch
    %13 = sbr.rel (%p11) target = $region9
  $region8: #{group_norm_scale_shift.1} parent=0 // pred_region
    %vm14 = vcmask 24576
    %15 = vst.msk [vmem:[%s1] sm:$0x1] %vm14, 0.0
    %16 = vst.msk [vmem:[%s2] sm:$0x1] %vm14, 0.0
  $region9: #{group_norm_scale_shift.1} parent=0 // pred_fallthru
    _
  %v17 = vld [vmem:[%s0] sm:$0xff]
  %v18 = vld [vmem:[%s0 + $0x8] sm:$0xff]
  %v19 = vld [vmem:[%s0 + $0x10] sm:$0xff]
  %v20 = vld [vmem:[%s0 + $0x18] sm:$0xff]
  %v21 = vld [vmem:[%s0 + $0x20] sm:$0xff]
  %v22 = vld [vmem:[%s0 + $0x28] sm:$0xff]
  %v23 = vld [vmem:[%s0 + $0x30] sm:$0xff]
  %v24 = vld [vmem:[%s0 + $0x38] sm:$0xff]
  %v25 = vld [vmem:[%s0 + $0x40] sm:$0xff]
  %v26 = vld [vmem:[%s0 + $0x48] sm:$0xff]
  %v27 = vld [vmem:[%s0 + $0x50] sm:$0xff]
  %v28 = vld [vmem:[%s0 + $0x58] sm:$0xff]
  %v29 = vld [vmem:[%s0 + $0x60] sm:$0xff]
  %v30 = vld [vmem:[%s0 + $0x68] sm:$0xff]
  %v31 = vld [vmem:[%s0 + $0x70] sm:$0xff]
  %v32 = vld [vmem:[%s0 + $0x78] sm:$0xff]
  %v33 = vld [vmem:[%s0 + $0x80] sm:$0xff]
  %v34 = vld [vmem:[%s0 + $0x88] sm:$0xff]
  %v35 = vld [vmem:[%s0 + $0x90] sm:$0xff]
  %v36 = vld [vmem:[%s0 + $0x98] sm:$0xff]
  %v37 = vld [vmem:[%s0 + $0xa0] sm:$0xff]
  %v38 = vld [vmem:[%s0 + $0xa8] sm:$0xff]
  %v39 = vld [vmem:[%s0 + $0xb0] sm:$0xff]
  %v40 = vld [vmem:[%s0 + $0xb8] sm:$0xff]
  %v41 = vld [vmem:[%s0 + $0xc0] sm:$0xff]
  %v42 = vld [vmem:[%s0 + $0xc8] sm:$0xff]
  %v43 = vld [vmem:[%s0 + $0xd0] sm:$0xff]
  %v44 = vld [vmem:[%s0 + $0xd8] sm:$0xff]
  %v45 = vld [vmem:[%s0 + $0xe0] sm:$0xff]
  %v46 = vld [vmem:[%s0 + $0xe8] sm:$0xff]
  %v47 = vld [vmem:[%s0 + $0xf0] sm:$0xff]
  %v48 = vld [vmem:[%s0 + $0xf8] sm:$0xff]
  %v49 = vld [vmem:[%s0 + $0x100] sm:$0xff]
  %v50 = vld [vmem:[%s0 + $0x108] sm:$0xff]
  %v51 = vld [vmem:[%s0 + $0x110] sm:$0xff]
  %v52 = vld [vmem:[%s0 + $0x118] sm:$0xff]
  %v53 = vld [vmem:[%s0 + $0x120] sm:$0xff]
  %v54 = vld [vmem:[%s0 + $0x128] sm:$0xff]
  %v55 = vld [vmem:[%s0 + $0x130] sm:$0xff]
  %v56 = vld [vmem:[%s0 + $0x138] sm:$0xff]
  %v57 = vld [vmem:[%s0 + $0x140] sm:$0xff]
  %v58 = vld [vmem:[%s0 + $0x148] sm:$0xff]
  %v59 = vld [vmem:[%s0 + $0x150] sm:$0xff]
  %v60 = vld [vmem:[%s0 + $0x158] sm:$0xff]
  %v61 = vld [vmem:[%s0 + $0x160] sm:$0xff]
  %v62 = vld [vmem:[%s0 + $0x168] sm:$0xff]
  %v63 = vld [vmem:[%s0 + $0x170] sm:$0xff]
  %v64 = vld [vmem:[%s0 + $0x178] sm:$0xff]
  %v65 = vld [vmem:[%s0 + $0x180] sm:$0xff]
  %v66 = vld [vmem:[%s0 + $0x188] sm:$0xff]
  %v67 = vld [vmem:[%s0 + $0x190] sm:$0xff]
  %v68 = vld [vmem:[%s0 + $0x198] sm:$0xff]
  %v69 = vld [vmem:[%s0 + $0x1a0] sm:$0xff]
  %v70 = vld [vmem:[%s0 + $0x1a8] sm:$0xff]
  %v71 = vld [vmem:[%s0 + $0x1b0] sm:$0xff]
  %v72 = vld [vmem:[%s0 + $0x1b8] sm:$0xff]
  %v73 = vld [vmem:[%s0 + $0x1c0] sm:$0xff]
  %v74 = vld [vmem:[%s0 + $0x1c8] sm:$0xff]
  %v75 = vld [vmem:[%s0 + $0x1d0] sm:$0xff]
  %v76 = vld [vmem:[%s0 + $0x1d8] sm:$0xff]
  %v77 = vld [vmem:[%s0 + $0x1e0] sm:$0xff]
  %v78 = vld [vmem:[%s0 + $0x1e8] sm:$0xff]
  %v79 = vld [vmem:[%s0 + $0x1f0] sm:$0xff]
  %v80 = vld [vmem:[%s0 + $0x1f8] sm:$0xff]
  %v81 = vld [vmem:[%s1] sm:$0x1]
  %vm82 = vcmask 31744
  %v83 = vsel %vm82, %v17, 0.0
  %v84 = vsel %vm82, %v18, 0.0
  %v85 = vadd.f32 %v83, %v84
  %v86 = vsel %vm82, %v19, 0.0
  %v87 = vadd.f32 %v85, %v86
  %v88 = vsel %vm82, %v20, 0.0
  %v89 = vadd.f32 %v87, %v88
  %v90 = vsel %vm82, %v21, 0.0
  %v91 = vadd.f32 %v89, %v90
  %v92 = vsel %vm82, %v22, 0.0
  %v93 = vadd.f32 %v91, %v92
  %v94 = vsel %vm82, %v23, 0.0
  %v95 = vadd.f32 %v93, %v94
  %v96 = vsel %vm82, %v24, 0.0
  %v97 = vadd.f32 %v95, %v96
  %v98 = vsel %vm82, %v25, 0.0
  %v99 = vadd.f32 %v97, %v98
  %v100 = vsel %vm82, %v26, 0.0
  %v101 = vadd.f32 %v99, %v100
  %v102 = vsel %vm82, %v27, 0.0
  %v103 = vadd.f32 %v101, %v102
  %v104 = vsel %vm82, %v28, 0.0
  %v105 = vadd.f32 %v103, %v104
  %v106 = vsel %vm82, %v29, 0.0
  %v107 = vadd.f32 %v105, %v106
  %v108 = vsel %vm82, %v30, 0.0
  %v109 = vadd.f32 %v107, %v108
  %v110 = vsel %vm82, %v31, 0.0
  %v111 = vadd.f32 %v109, %v110
  %v112 = vsel %vm82, %v32, 0.0
  %v113 = vadd.f32 %v111, %v112
  %v114 = vsel %vm82, %v33, 0.0
  %v115 = vadd.f32 %v113, %v114
  %v116 = vsel %vm82, %v34, 0.0
  %v117 = vadd.f32 %v115, %v116
  %v118 = vsel %vm82, %v35, 0.0
  %v119 = vadd.f32 %v117, %v118
  %v120 = vsel %vm82, %v36, 0.0
  %v121 = vadd.f32 %v119, %v120
  %v122 = vsel %vm82, %v37, 0.0
  %v123 = vadd.f32 %v121, %v122
  %v124 = vsel %vm82, %v38, 0.0
  %v125 = vadd.f32 %v123, %v124
  %v126 = vsel %vm82, %v39, 0.0
  %v127 = vadd.f32 %v125, %v126
  %v128 = vsel %vm82, %v40, 0.0
  %v129 = vadd.f32 %v127, %v128
  %v130 = vsel %vm82, %v41, 0.0
  %v131 = vadd.f32 %v129, %v130
  %v132 = vsel %vm82, %v42, 0.0
  %v133 = vadd.f32 %v131, %v132
  %v134 = vsel %vm82, %v43, 0.0
  %v135 = vadd.f32 %v133, %v134
  %v136 = vsel %vm82, %v44, 0.0
  %v137 = vadd.f32 %v135, %v136
  %v138 = vsel %vm82, %v45, 0.0
  %v139 = vadd.f32 %v137, %v138
  %v140 = vsel %vm82, %v46, 0.0
  %v141 = vadd.f32 %v139, %v140
  %v142 = vsel %vm82, %v47, 0.0
  %v143 = vadd.f32 %v141, %v142
  %v144 = vsel %vm82, %v48, 0.0
  %v145 = vadd.f32 %v143, %v144
  %v146 = vsel %vm82, %v49, 0.0
  %v147 = vadd.f32 %v145, %v146
  %v148 = vsel %vm82, %v50, 0.0
  %v149 = vadd.f32 %v147, %v148
  %v150 = vsel %vm82, %v51, 0.0
  %v151 = vadd.f32 %v149, %v150
  %v152 = vsel %vm82, %v52, 0.0
  %v153 = vadd.f32 %v151, %v152
  %v154 = vsel %vm82, %v53, 0.0
  %v155 = vadd.f32 %v153, %v154
  %v156 = vsel %vm82, %v54, 0.0
  %v157 = vadd.f32 %v155, %v156
  %v158 = vsel %vm82, %v55, 0.0
  %v159 = vadd.f32 %v157, %v158
  %v160 = vsel %vm82, %v56, 0.0
  %v161 = vadd.f32 %v159, %v160
  %v162 = vsel %vm82, %v57, 0.0
  %v163 = vadd.f32 %v161, %v162
  %v164 = vsel %vm82, %v58, 0.0
  %v165 = vadd.f32 %v163, %v164
  %v166 = vsel %vm82, %v59, 0.0
  %v167 = vadd.f32 %v165, %v166
  %v168 = vsel %vm82, %v60, 0.0
  %v169 = vadd.f32 %v167, %v168
  %v170 = vsel %vm82, %v61, 0.0
  %v171 = vadd.f32 %v169, %v170
  %v172 = vsel %vm82, %v62, 0.0
  %v173 = vadd.f32 %v171, %v172
  %v174 = vsel %vm82, %v63, 0.0
  %v175 = vadd.f32 %v173, %v174
  %v176 = vsel %vm82, %v64, 0.0
  %v177 = vadd.f32 %v175, %v176
  %v178 = vsel %vm82, %v65, 0.0
  %v179 = vadd.f32 %v177, %v178
  %v180 = vsel %vm82, %v66, 0.0
  %v181 = vadd.f32 %v179, %v180
  %v182 = vsel %vm82, %v67, 0.0
  %v183 = vadd.f32 %v181, %v182
  %v184 = vsel %vm82, %v68, 0.0
  %v185 = vadd.f32 %v183, %v184
  %v186 = vsel %vm82, %v69, 0.0
  %v187 = vadd.f32 %v185, %v186
  %v188 = vsel %vm82, %v70, 0.0
  %v189 = vadd.f32 %v187, %v188
  %v190 = vsel %vm82, %v71, 0.0
  %v191 = vadd.f32 %v189, %v190
  %v192 = vsel %vm82, %v72, 0.0
  %v193 = vadd.f32 %v191, %v192
  %v194 = vsel %vm82, %v73, 0.0
  %v195 = vadd.f32 %v193, %v194
  %v196 = vsel %vm82, %v74, 0.0
  %v197 = vadd.f32 %v195, %v196
  %v198 = vsel %vm82, %v75, 0.0
  %v199 = vadd.f32 %v197, %v198
  %v200 = vsel %vm82, %v76, 0.0
  %v201 = vadd.f32 %v199, %v200
  %v202 = vsel %vm82, %v77, 0.0
  %v203 = vadd.f32 %v201, %v202
  %v204 = vsel %vm82, %v78, 0.0
  %v205 = vadd.f32 %v203, %v204
  %v206 = vsel %vm82, %v79, 0.0
  %v207 = vadd.f32 %v205, %v206
  %v208 = vsel %vm82, %v80, 0.0
  %v209 = vadd.f32 %v207, %v208
  %v210 = vrot.slane %v209, 4
  %v211 = vadd.f32 %v209, %v210
  %v212 = vrot.slane %v211, 2
  %v213 = vadd.f32 %v211, %v212
  %v214 = vrot.slane %v213, 1
  %v215 = vadd.f32 %v213, %v214
  %v216 = vadd.f32 %v81, %v215
  %vm217 = vcmask 24576
  %218 = vst.msk [vmem:[%s1] sm:$0x1] %vm217, %v216
  %v219 = vld [vmem:[%s2] sm:$0x1]
  %v220 = vmul.f32 %v17, %v17
  %v221 = vmul.f32 %v18, %v18
  %v222 = vmul.f32 %v19, %v19
  %v223 = vmul.f32 %v20, %v20
  %v224 = vmul.f32 %v21, %v21
  %v225 = vmul.f32 %v22, %v22
  %v226 = vmul.f32 %v23, %v23
  %v227 = vmul.f32 %v24, %v24
  %v228 = vmul.f32 %v25, %v25
  %v229 = vmul.f32 %v26, %v26
  %v230 = vmul.f32 %v27, %v27
  %v231 = vmul.f32 %v28, %v28
  %v232 = vmul.f32 %v29, %v29
  %v233 = vmul.f32 %v30, %v30
  %v234 = vmul.f32 %v31, %v31
  %v235 = vmul.f32 %v32, %v32
  %v236 = vmul.f32 %v33, %v33
  %v237 = vmul.f32 %v34, %v34
  %v238 = vmul.f32 %v35, %v35
  %v239 = vmul.f32 %v36, %v36
  %v240 = vmul.f32 %v37, %v37
  %v241 = vmul.f32 %v38, %v38
  %v242 = vmul.f32 %v39, %v39
  %v243 = vmul.f32 %v40, %v40
  %v244 = vmul.f32 %v41, %v41
  %v245 = vmul.f32 %v42, %v42
  %v246 = vmul.f32 %v43, %v43
  %v247 = vmul.f32 %v44, %v44
  %v248 = vmul.f32 %v45, %v45
  %v249 = vmul.f32 %v46, %v46
  %v250 = vmul.f32 %v47, %v47
  %v251 = vmul.f32 %v48, %v48
  %v252 = vmul.f32 %v49, %v49
  %v253 = vmul.f32 %v50, %v50
  %v254 = vmul.f32 %v51, %v51
  %v255 = vmul.f32 %v52, %v52
  %v256 = vmul.f32 %v53, %v53
  %v257 = vmul.f32 %v54, %v54
  %v258 = vmul.f32 %v55, %v55
  %v259 = vmul.f32 %v56, %v56
  %v260 = vmul.f32 %v57, %v57
  %v261 = vmul.f32 %v58, %v58
  %v262 = vmul.f32 %v59, %v59
  %v263 = vmul.f32 %v60, %v60
  %v264 = vmul.f32 %v61, %v61
  %v265 = vmul.f32 %v62, %v62
  %v266 = vmul.f32 %v63, %v63
  %v267 = vmul.f32 %v64, %v64
  %v268 = vmul.f32 %v65, %v65
  %v269 = vmul.f32 %v66, %v66
  %v270 = vmul.f32 %v67, %v67
  %v271 = vmul.f32 %v68, %v68
  %v272 = vmul.f32 %v69, %v69
  %v273 = vmul.f32 %v70, %v70
  %v274 = vmul.f32 %v71, %v71
  %v275 = vmul.f32 %v72, %v72
  %v276 = vmul.f32 %v73, %v73
  %v277 = vmul.f32 %v74, %v74
  %v278 = vmul.f32 %v75, %v75
  %v279 = vmul.f32 %v76, %v76
  %v280 = vmul.f32 %v77, %v77
  %v281 = vmul.f32 %v78, %v78
  %v282 = vmul.f32 %v79, %v79
  %v283 = vmul.f32 %v80, %v80
  %v284 = vsel %vm82, %v220, 0.0
  %v285 = vsel %vm82, %v221, 0.0
  %v286 = vadd.f32 %v284, %v285
  %v287 = vsel %vm82, %v222, 0.0
  %v288 = vadd.f32 %v286, %v287
  %v289 = vsel %vm82, %v223, 0.0
  %v290 = vadd.f32 %v288, %v289
  %v291 = vsel %vm82, %v224, 0.0
  %v292 = vadd.f32 %v290, %v291
  %v293 = vsel %vm82, %v225, 0.0
  %v294 = vadd.f32 %v292, %v293
  %v295 = vsel %vm82, %v226, 0.0
  %v296 = vadd.f32 %v294, %v295
  %v297 = vsel %vm82, %v227, 0.0
  %v298 = vadd.f32 %v296, %v297
  %v299 = vsel %vm82, %v228, 0.0
  %v300 = vadd.f32 %v298, %v299
  %v301 = vsel %vm82, %v229, 0.0
  %v302 = vadd.f32 %v300, %v301
  %v303 = vsel %vm82, %v230, 0.0
  %v304 = vadd.f32 %v302, %v303
  %v305 = vsel %vm82, %v231, 0.0
  %v306 = vadd.f32 %v304, %v305
  %v307 = vsel %vm82, %v232, 0.0
  %v308 = vadd.f32 %v306, %v307
  %v309 = vsel %vm82, %v233, 0.0
  %v310 = vadd.f32 %v308, %v309
  %v311 = vsel %vm82, %v234, 0.0
  %v312 = vadd.f32 %v310, %v311
  %v313 = vsel %vm82, %v235, 0.0
  %v314 = vadd.f32 %v312, %v313
  %v315 = vsel %vm82, %v236, 0.0
  %v316 = vadd.f32 %v314, %v315
  %v317 = vsel %vm82, %v237, 0.0
  %v318 = vadd.f32 %v316, %v317
  %v319 = vsel %vm82, %v238, 0.0
  %v320 = vadd.f32 %v318, %v319
  %v321 = vsel %vm82, %v239, 0.0
  %v322 = vadd.f32 %v320, %v321
  %v323 = vsel %vm82, %v240, 0.0
  %v324 = vadd.f32 %v322, %v323
  %v325 = vsel %vm82, %v241, 0.0
  %v326 = vadd.f32 %v324, %v325
  %v327 = vsel %vm82, %v242, 0.0
  %v328 = vadd.f32 %v326, %v327
  %v329 = vsel %vm82, %v243, 0.0
  %v330 = vadd.f32 %v328, %v329
  %v331 = vsel %vm82, %v244, 0.0
  %v332 = vadd.f32 %v330, %v331
  %v333 = vsel %vm82, %v245, 0.0
  %v334 = vadd.f32 %v332, %v333
  %v335 = vsel %vm82, %v246, 0.0
  %v336 = vadd.f32 %v334, %v335
  %v337 = vsel %vm82, %v247, 0.0
  %v338 = vadd.f32 %v336, %v337
  %v339 = vsel %vm82, %v248, 0.0
  %v340 = vadd.f32 %v338, %v339
  %v341 = vsel %vm82, %v249, 0.0
  %v342 = vadd.f32 %v340, %v341
  %v343 = vsel %vm82, %v250, 0.0
  %v344 = vadd.f32 %v342, %v343
  %v345 = vsel %vm82, %v251, 0.0
  %v346 = vadd.f32 %v344, %v345
  %v347 = vsel %vm82, %v252, 0.0
  %v348 = vadd.f32 %v346, %v347
  %v349 = vsel %vm82, %v253, 0.0
  %v350 = vadd.f32 %v348, %v349
  %v351 = vsel %vm82, %v254, 0.0
  %v352 = vadd.f32 %v350, %v351
  %v353 = vsel %vm82, %v255, 0.0
  %v354 = vadd.f32 %v352, %v353
  %v355 = vsel %vm82, %v256, 0.0
  %v356 = vadd.f32 %v354, %v355
  %v357 = vsel %vm82, %v257, 0.0
  %v358 = vadd.f32 %v356, %v357
  %v359 = vsel %vm82, %v258, 0.0
  %v360 = vadd.f32 %v358, %v359
  %v361 = vsel %vm82, %v259, 0.0
  %v362 = vadd.f32 %v360, %v361
  %v363 = vsel %vm82, %v260, 0.0
  %v364 = vadd.f32 %v362, %v363
  %v365 = vsel %vm82, %v261, 0.0
  %v366 = vadd.f32 %v364, %v365
  %v367 = vsel %vm82, %v262, 0.0
  %v368 = vadd.f32 %v366, %v367
  %v369 = vsel %vm82, %v263, 0.0
  %v370 = vadd.f32 %v368, %v369
  %v371 = vsel %vm82, %v264, 0.0
  %v372 = vadd.f32 %v370, %v371
  %v373 = vsel %vm82, %v265, 0.0
  %v374 = vadd.f32 %v372, %v373
  %v375 = vsel %vm82, %v266, 0.0
  %v376 = vadd.f32 %v374, %v375
  %v377 = vsel %vm82, %v267, 0.0
  %v378 = vadd.f32 %v376, %v377
  %v379 = vsel %vm82, %v268, 0.0
  %v380 = vadd.f32 %v378, %v379
  %v381 = vsel %vm82, %v269, 0.0
  %v382 = vadd.f32 %v380, %v381
  %v383 = vsel %vm82, %v270, 0.0
  %v384 = vadd.f32 %v382, %v383
  %v385 = vsel %vm82, %v271, 0.0
  %v386 = vadd.f32 %v384, %v385
  %v387 = vsel %vm82, %v272, 0.0
  %v388 = vadd.f32 %v386, %v387
  %v389 = vsel %vm82, %v273, 0.0
  %v390 = vadd.f32 %v388, %v389
  %v391 = vsel %vm82, %v274, 0.0
  %v392 = vadd.f32 %v390, %v391
  %v393 = vsel %vm82, %v275, 0.0
  %v394 = vadd.f32 %v392, %v393
  %v395 = vsel %vm82, %v276, 0.0
  %v396 = vadd.f32 %v394, %v395
  %v397 = vsel %vm82, %v277, 0.0
  %v398 = vadd.f32 %v396, %v397
  %v399 = vsel %vm82, %v278, 0.0
  %v400 = vadd.f32 %v398, %v399
  %v401 = vsel %vm82, %v279, 0.0
  %v402 = vadd.f32 %v400, %v401
  %v403 = vsel %vm82, %v280, 0.0
  %v404 = vadd.f32 %v402, %v403
  %v405 = vsel %vm82, %v281, 0.0
  %v406 = vadd.f32 %v404, %v405
  %v407 = vsel %vm82, %v282, 0.0
  %v408 = vadd.f32 %v406, %v407
  %v409 = vsel %vm82, %v283, 0.0
  %v410 = vadd.f32 %v408, %v409
  %v411 = vrot.slane %v410, 4
  %v412 = vadd.f32 %v410, %v411
  %v413 = vrot.slane %v412, 2
  %v414 = vadd.f32 %v412, %v413
  %v415 = vrot.slane %v414, 1
  %v416 = vadd.f32 %v414, %v415
  %v417 = vadd.f32 %v219, %v416
  %418 = vst.msk [vmem:[%s2] sm:$0x1] %vm217, %v417
  // Predicated region
  $region10: #{group_norm_scale_shift.1} parent=0 // pred_check
    _
  $region11: #{group_norm_scale_shift.1} parent=0 // pred_check_branch
    %420 = sbr.rel (0) target = $region13
  $region12: #{group_norm_scale_shift.1} parent=0 // pred_region
    _
  $region13: #{group_norm_scale_shift.1} parent=0 // pred_fallthru
    _
  // Predicated region
  $region14: #{group_norm_scale_shift.1} parent=0 // pred_check
    _
  $region15: #{group_norm_scale_shift.1} parent=0 // pred_check_branch
    %422 = sbr.rel (0) target = $region17
  $region16: #{group_norm_scale_shift.1} parent=0 // pred_region
    _
  $region17: #{group_norm_scale_shift.1} parent=0 // pred_fallthru
    _
  // Predicated region
  $region18: #{group_norm_scale_shift.1} parent=0 // pred_check
    _
  $region19: #{group_norm_scale_shift.1} parent=0 // pred_check_branch
    %424 = sbr.rel (0) target = $region21
  $region20: #{group_norm_scale_shift.1} parent=0 // pred_region
    _
  $region21: #{group_norm_scale_shift.1} parent=0 // pred_fallthru
    _
  // Predicated region
  $region22: #{group_norm_scale_shift.1} parent=0 // pred_check
    _
  $region23: #{group_norm_scale_shift.1} parent=0 // pred_check_branch
    %426 = sbr.rel (0) target = $region25
  $region24: #{group_norm_scale_shift.1} parent=0 // pred_region
    _
  $region25: #{group_norm_scale_shift.1} parent=0 // pred_fallthru
    _

</llo_original>
